<compile_context>
chip_gen: v7x
topology: tpu7x:2x2x1
jax: 0.10.0
libtpu: 0.0.40
codegen_flags: <defaults>
</compile_context>

<pallas_src>
import functools

import jax
import jax.numpy as jnp
from jax.experimental import pallas as pl
from jax.experimental.pallas import tpu as pltpu


def _hbm_copy_kernel(x_hbm, o_hbm, sem):
    """Pure DMA-engine identity: one HBM->HBM async copy of the whole ref."""
    cp = pltpu.make_async_copy(x_hbm, o_hbm, sem)
    cp.start()
    cp.wait()


@functools.partial(jax.jit, static_argnames=("donate",))
def hook_capture(x: jax.Array, *, donate: bool = False) -> jax.Array:
    """Identity 'capture' of an intermediate tensor.

    donate=False: snapshot into a fresh HBM buffer via a single HBM->HBM DMA
    (no VMEM, no TensorCore work, hits the HBM roofline).
    donate=True: the caller accepts aliasing, so no copy is needed at all —
    the input is returned as-is (zero device work).
    """
    if donate or x.size == 0:
        return x

    nbytes = int(x.size) * jnp.dtype(x.dtype).itemsize
    return pl.pallas_call(
        _hbm_copy_kernel,
        out_shape=jax.ShapeDtypeStruct(x.shape, x.dtype),
        in_specs=[pl.BlockSpec(memory_space=pl.ANY)],
        out_specs=pl.BlockSpec(memory_space=pl.ANY),
        scratch_shapes=[pltpu.SemaphoreType.DMA(())],
        cost_estimate=pl.CostEstimate(
            flops=0, transcendentals=0, bytes_accessed=2 * nbytes
        ),
    )(x)


class ForwardHook:
    """JAX/Pallas port of gptanalyzer.nn_utils.ForwardHook.

    No parameters.  forward(**kwargs) -> None, exactly like the PyTorch
    module.  By default it is a pure no-op (zero device work).  With
    capture=True, array-valued kwargs are snapshotted through the HBM->HBM
    DMA kernel fire-and-forget (no host sync) and stashed in `self.captured`
    for hook observers to fetch lazily.
    """

    # TODO(synk): PyTorch's hook-registration machinery (register_forward_hook)
    # has no Pallas equivalent; `self.captured` stands in as the capture point.

    def __init__(self, capture: bool = False):
        self.capture = capture
        self.captured = {}

    def forward(self, **kwargs) -> None:
        if self.capture:
            for name, v in kwargs.items():
                if isinstance(v, jax.Array):
                    # Fire-and-forget: no block_until_ready here, so the DMA
                    # overlaps with surrounding model compute.
                    self.captured[name] = hook_capture(v)
        del kwargs
        return None

    __call__ = forward


if __name__ == "__main__":
    key = jax.random.PRNGKey(0)
    # Small NCHW activation, as a forward-hook would typically observe.
    x = jax.random.normal(key, (2, 4, 16, 16), dtype=jnp.float32)

    # Snapshot path: single HBM->HBM DMA, no VMEM / TC involvement.
    captured = hook_capture(x)
    jax.block_until_ready(captured)
    assert captured.shape == x.shape and captured.dtype == x.dtype
    assert bool(jnp.all(captured == x))

    # Donating path: no kernel launch at all, result aliases the input.
    captured_donated = hook_capture(x, donate=True)
    jax.block_until_ready(captured_donated)
    assert bool(jnp.all(captured_donated == x))

    # Irregular (non-multiple-of-128) element count and a bf16 tensor both go
    # through the same single DMA path — no fallback cliffs.
    y = jax.random.normal(jax.random.PRNGKey(1), (3, 5, 7), dtype=jnp.float32)
    cy = hook_capture(y)
    jax.block_until_ready(cy)
    assert bool(jnp.all(cy == y))

    z = jax.random.normal(jax.random.PRNGKey(2), (2, 8, 32), dtype=jnp.bfloat16)
    cz = hook_capture(z)
    jax.block_until_ready(cz)
    assert cz.dtype == jnp.bfloat16 and bool(jnp.all(cz == z))

    # Module with PyTorch-identical semantics: forward(**kwargs) -> None,
    # default path does zero device work.
    hook = ForwardHook()
    assert hook(hidden_states=x) is None

    # Optional capture path: lazy, no host sync inside forward().
    hook_cap = ForwardHook(capture=True)
    assert hook_cap(hidden_states=x) is None
    jax.block_until_ready(hook_cap.captured["hidden_states"])
    assert bool(jnp.all(hook_cap.captured["hidden_states"] == x))

    print("KERNEL_OK")
</pallas_src>

<mosaic_0001>
module attributes {stable_mosaic.version = 11 : i64} {
  func.func @_hbm_copy_kernel(%arg0: memref<2x4x16x16xf32, #tpu.memory_space<any>>, %arg1: memref<2x4x16x16xf32, #tpu.memory_space<any>>, %arg2: memref<!tpu.dma_semaphore, #tpu.memory_space<semaphore_mem>>) attributes {dimension_semantics = [], scalar_prefetch = 0 : i64, scratch_operands = 1 : i64, tpu.core_type = #tpu.core_type<tc>} {
    tpu.enqueue_dma source(%arg0 : memref<2x4x16x16xf32, #tpu.memory_space<any>>) target(%arg1 : memref<2x4x16x16xf32, #tpu.memory_space<any>>) target_semaphore(%arg2 : memref<!tpu.dma_semaphore, #tpu.memory_space<semaphore_mem>>)
    tpu.wait_dma2 semaphore(%arg2 : memref<!tpu.dma_semaphore, #tpu.memory_space<semaphore_mem>>) src(%arg0 : memref<2x4x16x16xf32, #tpu.memory_space<any>>) dst(%arg1 : memref<2x4x16x16xf32, #tpu.memory_space<any>>)
    return
  }
}

</mosaic_0001>

<llo_original>
// kernel: hook_capture.1
$region0: #{hook_capture.1}
  #allocation0 [shape = 'u32[]', space=smem, size = 0x4, offset = 0x4, fixed_abs, tag = 'smem constant byte address 0x4 - core index']
  #allocation1 [shape = 'u32[144,128]{1,0:T(1,128)}', space=vmem, size = 0x12000, scoped, tag = 'internal scratch']
  #allocation2 [shape = 's32[1]{0}', space=sflag, size = 0x4, scoped, tag = 'scratch operand']
  #allocation3 [shape = 's32[]', space=sflag, size = 0x4, offset = 0, fixed_abs, tag = 'sflag constant byte address 0x0 - dummy sync flag']
  #allocation4 [shape = 'u32[0]{0}', space=smem, size = 0, offset = 0, fixed_abs, tag = 'smem constant byte address 0x0 - null']
  %s0 = inlined_call_operand.hbm [shape: f32[2,4,16,16], index: 0, kind: input, shape index: {}]
  %s1 = inlined_call_operand.hbm [shape: f32[2,4,16,16], index: 1, kind: output, shape index: {}]
  %s2 = sld [smem:[#allocation0]]
  $region2: #{hook_capture.1} parent=0
    _
  %s4 = ssub.s32 1, %s2
  %s5 = scalar_select 0, %s4, %s2
  %s7 = sshll.u32 1, 14
  %s8 = sxor.u32 4294967295, %s7
  %s11 = sshll.u32 3, 24
  %s12 = sxor.u32 4294967295, %s11
  %s13 = sand.u32 0, %s12
  %s15 = sor.u32 %s13, 0
  %18 = dma.general %s0, 2048, %s1, [#allocation2], [#allocation3], [#allocation4], %s15, 0
  %s19 = smul.u32 2, 4
  %s20 = smul.u32 %s19, 16
  %s21 = smul.u32 %s20, 1
  %s22 = sshll.u32 %s21, 4
  %23 = dma.done [#allocation2], %s22
  %24 = vsyncmov [#allocation2]
  %s25 = vpop.sfrf %24
  %p26 = scmp.eq.s32.totalorder %s25, 0
  %p27 = pneg %p26
  %29 = shalt.err (%p27)

</llo_original>
